<compile_context>
chip_gen: v5e
topology: v5e:2x2
jax: 0.10.0
libtpu: 0.0.40
codegen_flags: <defaults>
</compile_context>

<pallas_src>
import jax
import jax.numpy as jnp
from jax.experimental import pallas as pl
from jax.experimental.pallas import tpu as pltpu

LANE = 128


def _round_up(x: int, m: int) -> int:
    return (x + m - 1) // m * m


# --------------------------------------------------------------------------- #
# Kernel
# --------------------------------------------------------------------------- #
def actor_mlp_kernel(obs_ref, w1_ref, b1_ref, w2_ref, w3_ref, act_ref):
    """One batch tile of the MLP actor forward, fully VMEM-resident.

    obs_ref : (TB, obs_dim) f32   -- cast to bf16 in-kernel (VPU)
    w1_ref  : (obs_dim, H1p) bf16
    b1_ref  : (1, H1p)       f32  -- layer-1 bias + constant 1.0 in spare lane
    w2_ref  : (H1p, H2p)     bf16 -- layer-2 weights with b2 folded as a row
    w3_ref  : (H2p, OUTp)    bf16 -- output weights with b3 folded as a row
    act_ref : (TB, OUTp)     bf16 -- tanh-squashed action (lane-dense, padded)
    """
    x = obs_ref[...].astype(jnp.bfloat16)

    # Layer 1: bf16 MXU matmul, f32 accumulate, f32 bias add + ReLU (VPU).
    # b1_ref carries a 1.0 in the spare lane; ReLU(1)=1, so the constant
    # survives and drives the folded biases of layers 2 and 3 through the MXU.
    h1 = jnp.dot(x, w1_ref[...], preferred_element_type=jnp.float32) + b1_ref[...]
    h1 = jnp.maximum(h1, 0.0)

    # Layer 2 (bias is a row of w2): f32 accumulate, ReLU.
    h2 = jnp.dot(h1.astype(jnp.bfloat16), w2_ref[...],
                 preferred_element_type=jnp.float32)
    h2 = jnp.maximum(h2, 0.0)

    # Output layer (bias is a row of w3) + tanh (EUP), stored as a full
    # 128-lane bf16 tile (unmasked vst, half the writeback bytes of f32).
    out = jnp.dot(h2.astype(jnp.bfloat16), w3_ref[...],
                  preferred_element_type=jnp.float32)
    act_ref[...] = jnp.tanh(out).astype(act_ref.dtype)


# --------------------------------------------------------------------------- #
# One-time weight preparation (hoisted out of the per-call path)
# --------------------------------------------------------------------------- #
def prepare_actor_params(params):
    """Pad to lane-dense widths, fold biases, cast matmul operands to bf16.

    Call once when the actor parameters change (e.g. after each optimizer
    step), NOT every forward.
    """
    w1, b1, w2, b2, w3, b3 = params
    obs_dim, h1 = w1.shape
    h2 = w2.shape[1]
    act_dim = w3.shape[1]

    # +1 guarantees a spare lane for the constant-1 bias-folding trick.
    h1p = _round_up(h1 + 1, LANE)
    h2p = _round_up(h2 + 1, LANE)
    outp = _round_up(act_dim, LANE)

    # Layer 1: padded weights; f32 bias with a 1.0 planted in spare lane h1.
    w1p = jnp.zeros((obs_dim, h1p), jnp.float32).at[:, :h1].set(w1)
    b1p = jnp.zeros((1, h1p), jnp.float32).at[:, :h1].set(b1.reshape(1, -1))
    b1p = b1p.at[0, h1].set(1.0)

    # Layer 2: b2 folded as row h1; constant forwarded to spare lane h2.
    w2p = jnp.zeros((h1p, h2p), jnp.float32).at[:h1, :h2].set(w2)
    w2p = w2p.at[h1, :h2].set(b2.reshape(-1))
    w2p = w2p.at[h1, h2].set(1.0)

    # Output layer: b3 folded as row h2.
    w3p = jnp.zeros((h2p, outp), jnp.float32).at[:h2, :act_dim].set(w3)
    w3p = w3p.at[h2, :act_dim].set(b3.reshape(-1))

    return (w1p.astype(jnp.bfloat16), b1p,
            w2p.astype(jnp.bfloat16), w3p.astype(jnp.bfloat16))


# --------------------------------------------------------------------------- #
# Forward wrapper (ActorQCritic.forward semantics)
# --------------------------------------------------------------------------- #
def actor_q_critic_forward(obs, prepared, *, act_dim, hidden_sizes=(64, 64),
                           deterministic=True, batch_tile=2048,
                           noise=0.1, key=None):
    """Pallas-backed equivalent of ActorQCritic.forward(obs, deterministic)."""
    w1p, b1p, w2p, w3p = prepared
    batch, obs_dim = obs.shape
    h1p, h2p, outp = w1p.shape[1], w2p.shape[1], w3p.shape[1]

    # --- batch tiling: multiples of 8; cap at ceil(batch/2) so the grid has at
    # least 2 steps whenever possible (v7x megacore sharding of the batch axis).
    b8 = _round_up(batch, 8)
    tb = min(_round_up(batch_tile, 8), _round_up(pl.cdiv(b8, 2), 8), b8)
    tb = max(tb, 8)
    bp = _round_up(b8, tb)
    # Skip the obs copy entirely when no padding is needed (common case).
    obs_p = obs if bp == batch else jnp.pad(obs, ((0, bp - batch), (0, 0)))
    grid = (bp // tb,)

    # --- cost estimate on REAL (unpadded) dims so XLA schedules this tiny op
    # aggressively around surrounding work.
    h1d, h2d = hidden_sizes
    flops = 2 * batch * (obs_dim * h1d + h1d * h2d + h2d * act_dim)
    bytes_accessed = (batch * obs_dim * 4 + w1p.size * 2 + b1p.size * 4
                      + w2p.size * 2 + w3p.size * 2 + batch * act_dim * 2)
    cost = pl.CostEstimate(flops=flops, transcendentals=batch * act_dim,
                           bytes_accessed=bytes_accessed)

    const = lambda i: (0, 0)  # weights/bias: same block every grid step
    grid_spec = pltpu.PrefetchScalarGridSpec(
        num_scalar_prefetch=0,
        grid=grid,
        in_specs=[
            pl.BlockSpec((tb, obs_dim), lambda i: (i, 0)),
            pl.BlockSpec((obs_dim, h1p), const),
            pl.BlockSpec((1, h1p), const),
            pl.BlockSpec((h1p, h2p), const),
            pl.BlockSpec((h2p, outp), const),
        ],
        out_specs=pl.BlockSpec((tb, outp), lambda i: (i, 0)),
    )

    out_padded = pl.pallas_call(
        actor_mlp_kernel,
        out_shape=jax.ShapeDtypeStruct((bp, outp), jnp.bfloat16),
        grid_spec=grid_spec,
        compiler_params=pltpu.CompilerParams(
            dimension_semantics=("parallel",),
            vmem_limit_bytes=32 * 1024 * 1024,  # safe on v5e/v6e/v7x at TB<=4096
        ),
        cost_estimate=cost,
    )(obs_p, w1p, b1p, w2p, w3p)

    action = out_padded[:batch, :act_dim].astype(jnp.float32)

    if not deterministic:
        # MLPActor.predict exploration path: action + N(0, noise), clamped.
        # TODO(synk): noise scale should come from the model config (self._noise).
        if key is None:
            raise ValueError("deterministic=False requires an explicit PRNG key")
        action = jnp.clip(
            action + noise * jax.random.normal(key, action.shape, jnp.float32),
            -1.0, 1.0)
    return action


# --------------------------------------------------------------------------- #
# Synthetic params (matching MLPActor layer shapes; not a checkpoint)
# --------------------------------------------------------------------------- #
def init_actor_params(key, obs_dim, hidden_sizes, act_dim):
    sizes = [obs_dim, *hidden_sizes, act_dim]
    params = []
    for i in range(len(sizes) - 1):
        key, wk, bk = jax.random.split(key, 3)
        scale = 1.0 / jnp.sqrt(jnp.float32(sizes[i]))
        w = jax.random.uniform(wk, (sizes[i], sizes[i + 1]), jnp.float32,
                               minval=-scale, maxval=scale)
        b = jax.random.uniform(bk, (1, sizes[i + 1]), jnp.float32,
                               minval=-scale, maxval=scale)
        params.extend([w, b])
    return tuple(params)


if __name__ == "__main__":
    # Small shapes consistent with the module: obs_dim=16, hidden_sizes=(64, 64),
    # act_dim=4, batch=8.
    batch, obs_dim, act_dim = 8, 16, 4
    hidden_sizes = (64, 64)

    key = jax.random.PRNGKey(0)
    key, obs_key = jax.random.split(key)
    obs = jax.random.normal(obs_key, (batch, obs_dim), dtype=jnp.float32)

    params = init_actor_params(key, obs_dim, hidden_sizes, act_dim)

    # One-time weight prep (hoisted out of the per-call path).
    prepared = prepare_actor_params(params)

    forward = jax.jit(
        actor_q_critic_forward,
        static_argnames=("act_dim", "hidden_sizes", "deterministic", "batch_tile"))

    action = forward(obs, prepared, act_dim=act_dim, hidden_sizes=hidden_sizes,
                     deterministic=True)
    action = jax.block_until_ready(action)

    # Sanity: shape, finiteness, tanh squashing.
    assert action.shape == (batch, act_dim)
    assert bool(jnp.all(jnp.isfinite(action)))
    assert bool(jnp.all(jnp.abs(action) <= 1.0 + 1e-6))

    w1, b1, w2, b2, w3, b3 = params

    # bf16-emulated reference (same operand rounding as the kernel: bf16 matmul
    # operands, f32 accumulate; b1 f32, b2/b3 folded as bf16 weight rows).
    def bf(x):
        return x.astype(jnp.bfloat16).astype(jnp.float32)

    h1 = jnp.maximum(bf(obs) @ bf(w1) + b1, 0.0)
    h2 = jnp.maximum(bf(h1) @ bf(w2) + bf(b2), 0.0)
    ref_bf16 = jnp.tanh(bf(h2) @ bf(w3) + bf(b3))
    assert bool(jnp.allclose(action, ref_bf16, atol=1e-2, rtol=1e-2))

    # Full-precision reference (looser: bf16 matmul operands + bf16 output).
    ref_f32 = jnp.tanh(
        jnp.maximum(jnp.maximum(obs @ w1 + b1, 0.0) @ w2 + b2, 0.0) @ w3 + b3)
    assert bool(jnp.allclose(action, ref_f32, atol=5e-2, rtol=5e-2))

    print("KERNEL_OK")
</pallas_src>

<mosaic_0001>
module attributes {stable_mosaic.version = 11 : i64} {
  func.func @actor_mlp_kernel(%arg0: i32, %arg1: memref<8x16xf32, #tpu.memory_space<vmem>>, %arg2: memref<16x128xbf16, #tpu.memory_space<vmem>>, %arg3: memref<1x128xf32, #tpu.memory_space<vmem>>, %arg4: memref<128x128xbf16, #tpu.memory_space<vmem>>, %arg5: memref<128x128xbf16, #tpu.memory_space<vmem>>, %arg6: memref<8x128xbf16, #tpu.memory_space<vmem>>) attributes {dimension_semantics = [#tpu.dimension_semantics<parallel>], iteration_bounds = array<i64: 1>, scalar_prefetch = 0 : i64, scratch_operands = 0 : i64, tpu.core_type = #tpu.core_type<tc>, window_params = [{transform_indices = @transform_0, window_bounds = array<i64: 8, 16>}, {pipeline_mode = #tpu.pipeline_mode<synchronous>, transform_indices = @transform_1, window_bounds = array<i64: 16, 128>}, {pipeline_mode = #tpu.pipeline_mode<synchronous>, transform_indices = @transform_2, window_bounds = array<i64: 1, 128>}, {pipeline_mode = #tpu.pipeline_mode<synchronous>, transform_indices = @transform_3, window_bounds = array<i64: 128, 128>}, {pipeline_mode = #tpu.pipeline_mode<synchronous>, transform_indices = @transform_4, window_bounds = array<i64: 128, 128>}, {transform_indices = @transform_5, window_bounds = array<i64: 8, 128>}]} {
    %c0 = arith.constant 0 : index
    %c0_0 = arith.constant 0 : index
    %0 = vector.load %arg1[%c0, %c0_0] : memref<8x16xf32, #tpu.memory_space<vmem>>, vector<8x16xf32>
    %1 = arith.truncf %0 : vector<8x16xf32> to vector<8x16xbf16>
    %c0_1 = arith.constant 0 : index
    %c0_2 = arith.constant 0 : index
    %2 = vector.load %arg2[%c0_1, %c0_2] : memref<16x128xbf16, #tpu.memory_space<vmem>>, vector<16x128xbf16>
    %cst = arith.constant dense<0.000000e+00> : vector<8x128xf32>
    %3 = tpu.matmul %1, %2, %cst {dimension_numbers = #tpu.dot_dimension_numbers<[1], [0], [0], [1], [0, 0, 1, 1], [], []>} : vector<8x16xbf16>, vector<16x128xbf16>, vector<8x128xf32> -> vector<8x128xf32>
    %c0_3 = arith.constant 0 : index
    %c0_4 = arith.constant 0 : index
    %4 = vector.load %arg3[%c0_3, %c0_4] : memref<1x128xf32, #tpu.memory_space<vmem>>, vector<1x128xf32>
    %5 = vector.broadcast %4 : vector<1x128xf32> to vector<8x128xf32>
    %6 = arith.addf %3, %5 : vector<8x128xf32>
    %cst_5 = arith.constant 0.000000e+00 : f32
    %7 = vector.broadcast %cst_5 : f32 to vector<8x128xf32>
    %8 = arith.maximumf %6, %7 : vector<8x128xf32>
    %9 = arith.truncf %8 : vector<8x128xf32> to vector<8x128xbf16>
    %c0_6 = arith.constant 0 : index
    %c0_7 = arith.constant 0 : index
    %10 = vector.load %arg4[%c0_6, %c0_7] : memref<128x128xbf16, #tpu.memory_space<vmem>>, vector<128x128xbf16>
    %cst_8 = arith.constant dense<0.000000e+00> : vector<8x128xf32>
    %11 = tpu.matmul %9, %10, %cst_8 {dimension_numbers = #tpu.dot_dimension_numbers<[1], [0], [0], [1], [0, 0, 1, 1], [], []>} : vector<8x128xbf16>, vector<128x128xbf16>, vector<8x128xf32> -> vector<8x128xf32>
    %cst_9 = arith.constant 0.000000e+00 : f32
    %12 = vector.broadcast %cst_9 : f32 to vector<8x128xf32>
    %13 = arith.maximumf %11, %12 : vector<8x128xf32>
    %14 = arith.truncf %13 : vector<8x128xf32> to vector<8x128xbf16>
    %c0_10 = arith.constant 0 : index
    %c0_11 = arith.constant 0 : index
    %15 = vector.load %arg5[%c0_10, %c0_11] : memref<128x128xbf16, #tpu.memory_space<vmem>>, vector<128x128xbf16>
    %cst_12 = arith.constant dense<0.000000e+00> : vector<8x128xf32>
    %16 = tpu.matmul %14, %15, %cst_12 {dimension_numbers = #tpu.dot_dimension_numbers<[1], [0], [0], [1], [0, 0, 1, 1], [], []>} : vector<8x128xbf16>, vector<128x128xbf16>, vector<8x128xf32> -> vector<8x128xf32>
    %17 = math.tanh %16 : vector<8x128xf32>
    %18 = arith.truncf %17 : vector<8x128xf32> to vector<8x128xbf16>
    %c0_13 = arith.constant 0 : index
    %c0_14 = arith.constant 0 : index
    %19 = vector.load %arg6[%c0_13, %c0_14] : memref<8x128xbf16, #tpu.memory_space<vmem>>, vector<8x128xbf16>
    tpu.vector_store %arg6[%c0_13, %c0_14], %18 {strides = array<i32>} : memref<8x128xbf16, #tpu.memory_space<vmem>>, vector<8x128xbf16>,
    return
  }
  func.func @transform_0(%arg0: i32) -> (i32, i32) {
    %c0_i32 = arith.constant 0 : i32
    %c0_i32_0 = arith.constant 0 : i32
    return %arg0, %c0_i32 : i32, i32
  }
  func.func @transform_1(%arg0: i32) -> (i32, i32) {
    %c0_i32 = arith.constant 0 : i32
    %c0_i32_0 = arith.constant 0 : i32
    %c0_i32_1 = arith.constant 0 : i32
    return %c0_i32, %c0_i32_0 : i32, i32
  }
  func.func @transform_2(%arg0: i32) -> (i32, i32) {
    %c0_i32 = arith.constant 0 : i32
    %c0_i32_0 = arith.constant 0 : i32
    %c0_i32_1 = arith.constant 0 : i32
    return %c0_i32, %c0_i32_0 : i32, i32
  }
  func.func @transform_3(%arg0: i32) -> (i32, i32) {
    %c0_i32 = arith.constant 0 : i32
    %c0_i32_0 = arith.constant 0 : i32
    %c0_i32_1 = arith.constant 0 : i32
    return %c0_i32, %c0_i32_0 : i32, i32
  }
  func.func @transform_4(%arg0: i32) -> (i32, i32) {
    %c0_i32 = arith.constant 0 : i32
    %c0_i32_0 = arith.constant 0 : i32
    %c0_i32_1 = arith.constant 0 : i32
    return %c0_i32, %c0_i32_0 : i32, i32
  }
  func.func @transform_5(%arg0: i32) -> (i32, i32) {
    %c0_i32 = arith.constant 0 : i32
    %c0_i32_0 = arith.constant 0 : i32
    return %arg0, %c0_i32 : i32, i32
  }
}

</mosaic_0001>

<llo_original>
// kernel: actor_q_critic_forward.1
$region0: #{actor_q_critic_forward.1}
  #allocation0 [shape = 'u32[]', space=smem, size = 0x4, offset = 0x4, fixed_abs, tag = 'smem constant byte address 0x4 - core index']
  #allocation1 [shape = 'u32[72,128]{1,0:T(1,128)}', space=vmem, size = 0x9000, scoped, tag = 'internal scratch']
  %s0 = inlined_call_operand.hbm [shape: f32[8,16], index: 0, kind: input, shape index: {}]
  %s1 = inlined_call_operand.hbm [shape: bf16[16,128], index: 1, kind: input, shape index: {}]
  %s2 = inlined_call_operand.vmem [shape: f32[1,128], index: 2, kind: input, shape index: {}]
  %s3 = inlined_call_operand.hbm [shape: bf16[128,128], index: 3, kind: input, shape index: {}]
  %s4 = inlined_call_operand.hbm [shape: bf16[128,128], index: 4, kind: input, shape index: {}]
  %s5 = inlined_call_operand.vmem [shape: bf16[8,128], index: 5, kind: output, shape index: {}]
  %s6 = sld [smem:[#allocation0]]
  $region46: #{actor_q_critic_forward.1} parent=0
    _
  %s8 = ssub.s32 1, %s6
  %s9 = scalar_select 0, %s8, %s6
  $region1: #{actor_q_critic_forward.1} parent=0
    #allocation2 [shape = 'u8[4096]{0}', space=vmem, size = 0x1000, scoped, tag = 'input window, operand 0, single buffered']
    #allocation3 [shape = 's32[1]{0}', space=sflag, size = 0x4, scoped, tag = 'scoped memory for actor_q_critic_forward.1']
    #allocation4 [shape = 'u8[4096]{0}', space=vmem, size = 0x1000, scoped, tag = 'input window, operand 1, single buffered']
    #allocation5 [shape = 's32[1]{0}', space=sflag, size = 0x4, scoped, tag = 'scoped memory for actor_q_critic_forward.1']
    #allocation6 [shape = 'u8[32768]{0}', space=vmem, size = 0x8000, scoped, tag = 'input window, operand 3, single buffered']
    #allocation7 [shape = 'u8[32768]{0}', space=vmem, size = 0x8000, scoped, tag = 'input window, operand 4, single buffered']
    #allocation8 [shape = 's32[1]{0}', space=sflag, size = 0x4, scoped, tag = 'scoped memory for actor_q_critic_forward.1']
    %10 = vsyncpa [#allocation3], 0
    %11 = vsyncpa [#allocation5], 0
    %12 = vsyncpa [#allocation8], 0
    // Predicated region
    $region2: #{actor_q_critic_forward.1} parent=1 // pred_check
      _
    $region3: #{actor_q_critic_forward.1} parent=1 // pred_check_branch
      %14 = sbr.rel (0) target = $region5
    $region4: #{actor_q_critic_forward.1} parent=1 // pred_region
      %16 = vsyncadd [#allocation3], 0
      %s18 = sshll.u32 %s0, 4
      %s19 = int_to_ptr.hbm [resolvable:$true] %s18
      %s20 = sshll.u32 [#allocation2], 4
      %s21 = int_to_ptr.vmem [resolvable:$true] %s20
      %23 = dma.hbm_to_vmem [thread:$0]  %s19, 128, %s21, [#allocation3]
    $region5: #{actor_q_critic_forward.1} parent=1 // pred_fallthru
      _
    // Predicated region
    $region6: #{actor_q_critic_forward.1} parent=1 // pred_check
      _
    $region7: #{actor_q_critic_forward.1} parent=1 // pred_check_branch
      %25 = sbr.rel (0) target = $region9
    $region8: #{actor_q_critic_forward.1} parent=1 // pred_region
      %27 = vsyncadd [#allocation5], 0
      %s28 = sshll.u32 %s1, 4
      %s29 = int_to_ptr.hbm [resolvable:$true] %s28
      %s30 = sshll.u32 [#allocation4], 4
      %s31 = int_to_ptr.vmem [resolvable:$true] %s30
      %36 = dma.hbm_to_vmem [thread:$0]  %s29, 128, %s31, [#allocation5], 64, 64, 4
    $region9: #{actor_q_critic_forward.1} parent=1 // pred_fallthru
      _
    // Predicated region
    $region10: #{actor_q_critic_forward.1} parent=1 // pred_check
      _
    $region11: #{actor_q_critic_forward.1} parent=1 // pred_check_branch
      %38 = sbr.rel (0) target = $region13
    $region12: #{actor_q_critic_forward.1} parent=1 // pred_region
      _
    $region13: #{actor_q_critic_forward.1} parent=1 // pred_fallthru
      _
    // Predicated region
    $region14: #{actor_q_critic_forward.1} parent=1 // pred_check
      _
    $region15: #{actor_q_critic_forward.1} parent=1 // pred_check_branch
      %40 = sbr.rel (0) target = $region17
    $region16: #{actor_q_critic_forward.1} parent=1 // pred_region
      %42 = vsyncadd [#allocation5], 0
      %s43 = sshll.u32 %s3, 4
      %s44 = int_to_ptr.hbm [resolvable:$true] %s43
      %s45 = sshll.u32 [#allocation6], 4
      %s46 = int_to_ptr.vmem [resolvable:$true] %s45
      %51 = dma.hbm_to_vmem [thread:$0]  %s44, 1024, %s46, [#allocation5], 64, 64, 4
    $region17: #{actor_q_critic_forward.1} parent=1 // pred_fallthru
      _
    // Predicated region
    $region18: #{actor_q_critic_forward.1} parent=1 // pred_check
      _
    $region19: #{actor_q_critic_forward.1} parent=1 // pred_check_branch
      %53 = sbr.rel (0) target = $region21
    $region20: #{actor_q_critic_forward.1} parent=1 // pred_region
      %55 = vsyncadd [#allocation8], 0
      %s56 = sshll.u32 %s4, 4
      %s57 = int_to_ptr.hbm [resolvable:$true] %s56
      %s58 = sshll.u32 [#allocation7], 4
      %s59 = int_to_ptr.vmem [resolvable:$true] %s58
      %64 = dma.hbm_to_vmem [thread:$0]  %s57, 1024, %s59, [#allocation8], 64, 64, 4
    $region21: #{actor_q_critic_forward.1} parent=1 // pred_fallthru
      _
    // Predicated region
    $region22: #{actor_q_critic_forward.1} parent=1 // pred_check
      _
    $region23: #{actor_q_critic_forward.1} parent=1 // pred_check_branch
      %66 = sbr.rel (0) target = $region25
    $region24: #{actor_q_critic_forward.1} parent=1 // pred_region
      %68 = dma.done [#allocation3], 128
    $region25: #{actor_q_critic_forward.1} parent=1 // pred_fallthru
      _
    // Predicated region
    $region26: #{actor_q_critic_forward.1} parent=1 // pred_check
      _
    $region27: #{actor_q_critic_forward.1} parent=1 // pred_check_branch
      %70 = sbr.rel (0) target = $region29
    $region28: #{actor_q_critic_forward.1} parent=1 // pred_region
      %72 = dma.done [#allocation5], 128
    $region29: #{actor_q_critic_forward.1} parent=1 // pred_fallthru
      _
    // Predicated region
    $region30: #{actor_q_critic_forward.1} parent=1 // pred_check
      _
    $region31: #{actor_q_critic_forward.1} parent=1 // pred_check_branch
      %74 = sbr.rel (0) target = $region33
    $region32: #{actor_q_critic_forward.1} parent=1 // pred_region
      %76 = dma.done [#allocation5], 1024
    $region33: #{actor_q_critic_forward.1} parent=1 // pred_fallthru
      _
    // Predicated region
    $region34: #{actor_q_critic_forward.1} parent=1 // pred_check
      _
    $region35: #{actor_q_critic_forward.1} parent=1 // pred_check_branch
      %78 = sbr.rel (0) target = $region37
    $region36: #{actor_q_critic_forward.1} parent=1 // pred_region
      %80 = dma.done [#allocation8], 1024
    $region37: #{actor_q_critic_forward.1} parent=1 // pred_fallthru
      _
    %v82 = vld [vmem:[#allocation2] sm:$0xff]
    %v83 = vpack.c.bf16 %v82, %v82
    %v84 = vld [vmem:[#allocation4] sm:$0xf]
    %v85 = vld [vmem:[#allocation4 + $0x4] sm:$0xf]
    %v86 = vld [vmem:[%s2] sm:$0x1]
    %v88 = vperm.slane %v86, 0
    %v92 = vunpack.c.l.b16 %v84
    %v93 = vunpack.c.l.b16 %v85
    %v94 = vpack.c.b16 %v93, %v92
    %vm96 = vcmask 130048
    %v98 = vsel %vm96, %v83, 0
    %100 = vmatpush.bf16.msra.mxu0 0
    %101 = vmatpush.bf16.msra.mxu0 0
    %102 = vmatpush.bf16.msra.mxu0 0
    %103 = vmatpush.bf16.msra.mxu0 0
    %104 = vmatpush.bf16.msra.mxu0 0
    %105 = vmatpush.bf16.msra.mxu0 0
    %106 = vmatpush.bf16.msra.mxu0 0
    %107 = vmatpush.bf16.msra.mxu0 %v94
    %108 = vmatmul.bf16.gmra.mxu0 %v98
    %v109 = vpop.f32.mrf.mxu0
    %v110 = vadd.f32 %v88, %v109
    %v111 = vpop.f32.mrf.mxu0
    %112 = vdwg.mxu0
    %v113 = vmax.f32 %v110, 0.0
    %v114 = vpack.c.bf16 %v113, %v113
    %v115 = vld [vmem:[#allocation6] sm:$0xf]
    %v116 = vld [vmem:[#allocation6 + $0x4] sm:$0xf]
    %v117 = vld [vmem:[#allocation6 + $0x8] sm:$0xf]
    %v118 = vld [vmem:[#allocation6 + $0xc] sm:$0xf]
    %v119 = vld [vmem:[#allocation6 + $0x10] sm:$0xf]
    %v120 = vld [vmem:[#allocation6 + $0x14] sm:$0xf]
    %v121 = vld [vmem:[#allocation6 + $0x18] sm:$0xf]
    %v122 = vld [vmem:[#allocation6 + $0x1c] sm:$0xf]
    %v123 = vld [vmem:[#allocation6 + $0x20] sm:$0xf]
    %v124 = vld [vmem:[#allocation6 + $0x24] sm:$0xf]
    %v125 = vld [vmem:[#allocation6 + $0x28] sm:$0xf]
    %v126 = vld [vmem:[#allocation6 + $0x2c] sm:$0xf]
    %v127 = vld [vmem:[#allocation6 + $0x30] sm:$0xf]
    %v128 = vld [vmem:[#allocation6 + $0x34] sm:$0xf]
    %v129 = vld [vmem:[#allocation6 + $0x38] sm:$0xf]
    %v130 = vld [vmem:[#allocation6 + $0x3c] sm:$0xf]
    %v147 = vunpack.c.l.b16 %v115
    %v148 = vunpack.c.l.b16 %v116
    %v149 = vunpack.c.l.b16 %v117
    %v150 = vunpack.c.l.b16 %v118
    %v151 = vunpack.c.l.b16 %v119
    %v152 = vunpack.c.l.b16 %v120
    %v153 = vunpack.c.l.b16 %v121
    %v154 = vunpack.c.l.b16 %v122
    %v155 = vunpack.c.l.b16 %v123
    %v156 = vunpack.c.l.b16 %v124
    %v157 = vunpack.c.l.b16 %v125
    %v158 = vunpack.c.l.b16 %v126
    %v159 = vunpack.c.l.b16 %v127
    %v160 = vunpack.c.l.b16 %v128
    %v161 = vunpack.c.l.b16 %v129
    %v162 = vunpack.c.l.b16 %v130
    %v163 = vpack.c.b16 %v148, %v147
    %v164 = vpack.c.b16 %v150, %v149
    %v165 = vpack.c.b16 %v152, %v151
    %v166 = vpack.c.b16 %v154, %v153
    %v167 = vpack.c.b16 %v156, %v155
    %v168 = vpack.c.b16 %v158, %v157
    %v169 = vpack.c.b16 %v160, %v159
    %v170 = vpack.c.b16 %v162, %v161
    %179 = vmatpush.bf16.msra.mxu0 %v170
    %180 = vmatpush.bf16.msra.mxu0 %v169
    %181 = vmatpush.bf16.msra.mxu0 %v168
    %182 = vmatpush.bf16.msra.mxu0 %v167
    %183 = vmatpush.bf16.msra.mxu0 %v166
    %184 = vmatpush.bf16.msra.mxu0 %v165
    %185 = vmatpush.bf16.msra.mxu0 %v164
    %186 = vmatpush.bf16.msra.mxu0 %v163
    %187 = vmatmul.bf16.gmra.mxu0 %v114
    %v188 = vpop.f32.mrf.mxu0
    %v189 = vadd.f32 0.0, %v188
    %v190 = vpop.f32.mrf.mxu0
    %191 = vdwg.mxu0
    %v192 = vmax.f32 %v189, 0.0
    %v193 = vpack.c.bf16 %v192, %v192
    %v194 = vld [vmem:[#allocation7] sm:$0xf]
    %v195 = vld [vmem:[#allocation7 + $0x4] sm:$0xf]
    %v196 = vld [vmem:[#allocation7 + $0x8] sm:$0xf]
    %v197 = vld [vmem:[#allocation7 + $0xc] sm:$0xf]
    %v198 = vld [vmem:[#allocation7 + $0x10] sm:$0xf]
    %v199 = vld [vmem:[#allocation7 + $0x14] sm:$0xf]
    %v200 = vld [vmem:[#allocation7 + $0x18] sm:$0xf]
    %v201 = vld [vmem:[#allocation7 + $0x1c] sm:$0xf]
    %v202 = vld [vmem:[#allocation7 + $0x20] sm:$0xf]
    %v203 = vld [vmem:[#allocation7 + $0x24] sm:$0xf]
    %v204 = vld [vmem:[#allocation7 + $0x28] sm:$0xf]
    %v205 = vld [vmem:[#allocation7 + $0x2c] sm:$0xf]
    %v206 = vld [vmem:[#allocation7 + $0x30] sm:$0xf]
    %v207 = vld [vmem:[#allocation7 + $0x34] sm:$0xf]
    %v208 = vld [vmem:[#allocation7 + $0x38] sm:$0xf]
    %v209 = vld [vmem:[#allocation7 + $0x3c] sm:$0xf]
    %v226 = vunpack.c.l.b16 %v194
    %v227 = vunpack.c.l.b16 %v195
    %v228 = vunpack.c.l.b16 %v196
    %v229 = vunpack.c.l.b16 %v197
    %v230 = vunpack.c.l.b16 %v198
    %v231 = vunpack.c.l.b16 %v199
    %v232 = vunpack.c.l.b16 %v200
    %v233 = vunpack.c.l.b16 %v201
    %v234 = vunpack.c.l.b16 %v202
    %v235 = vunpack.c.l.b16 %v203
    %v236 = vunpack.c.l.b16 %v204
    %v237 = vunpack.c.l.b16 %v205
    %v238 = vunpack.c.l.b16 %v206
    %v239 = vunpack.c.l.b16 %v207
    %v240 = vunpack.c.l.b16 %v208
    %v241 = vunpack.c.l.b16 %v209
    %v242 = vpack.c.b16 %v227, %v226
    %v243 = vpack.c.b16 %v229, %v228
    %v244 = vpack.c.b16 %v231, %v230
    %v245 = vpack.c.b16 %v233, %v232
    %v246 = vpack.c.b16 %v235, %v234
    %v247 = vpack.c.b16 %v237, %v236
    %v248 = vpack.c.b16 %v239, %v238
    %v249 = vpack.c.b16 %v241, %v240
    %258 = vmatpush.bf16.msra.mxu0 %v249
    %259 = vmatpush.bf16.msra.mxu0 %v248
    %260 = vmatpush.bf16.msra.mxu0 %v247
    %261 = vmatpush.bf16.msra.mxu0 %v246
    %262 = vmatpush.bf16.msra.mxu0 %v245
    %263 = vmatpush.bf16.msra.mxu0 %v244
    %264 = vmatpush.bf16.msra.mxu0 %v243
    %265 = vmatpush.bf16.msra.mxu0 %v242
    %266 = vmatmul.bf16.gmra.mxu0 %v193
    %v267 = vpop.f32.mrf.mxu0
    %v268 = vadd.f32 0.0, %v267
    %v269 = vpop.f32.mrf.mxu0
    %270 = vdwg.mxu0
    %v271 = vtanh.pop %v268
    %v272 = vpack.c.bf16 %v271, %v271
    %273 = vst [vmem:[%s5] sm:$0xf] %v272
    // Predicated region
    $region38: #{actor_q_critic_forward.1} parent=1 // pred_check
      _
    $region39: #{actor_q_critic_forward.1} parent=1 // pred_check_branch
      %275 = sbr.rel (0) target = $region41
    $region40: #{actor_q_critic_forward.1} parent=1 // pred_region
      _
    $region41: #{actor_q_critic_forward.1} parent=1 // pred_fallthru
      _
    // Predicated region
    $region42: #{actor_q_critic_forward.1} parent=1 // pred_check
      _
    $region43: #{actor_q_critic_forward.1} parent=1 // pred_check_branch
      %277 = sbr.rel (0) target = $region45
    $region44: #{actor_q_critic_forward.1} parent=1 // pred_region
      _
    $region45: #{actor_q_critic_forward.1} parent=1 // pred_fallthru
      _
    %278 = vsyncpa [#allocation3], 1
    %279 = vsyncpa [#allocation5], 1
    %280 = vsyncpa [#allocation8], 1

</llo_original>
